<compile_context>
chip_gen: v5e
topology: v5e:2x2
jax: 0.10.0
libtpu: 0.0.40
codegen_flags: <defaults>
</compile_context>

<pallas_src>
import jax
import jax.numpy as jnp
from jax.experimental import pallas as pl
from jax.experimental.pallas import tpu as pltpu


def _round_up(x, m):
    return (x + m - 1) // m * m


def mlp_head_kernel(x_ref, w1_ref, b1_ref, w2_ref, b2_ref, o_ref):
    # x_ref block: (Bt, E) f32 straight from HBM; cast to bf16 in VMEM (VPU) so the
    # MXU runs bf16 with f32 accumulation -- no separate HBM pad/cast pass upstream.
    x = x_ref[...].astype(jnp.bfloat16)
    h = jnp.dot(x, w1_ref[...], preferred_element_type=jnp.float32)      # Linear(E -> H)
    h = jnp.tanh(h + b1_ref[...])                                        # Tanh (EUP), f32
    # TODO(synk): nn.Dropout(cf.Dropout_Rate) is identity at inference time.
    out = jnp.dot(h.astype(w2_ref.dtype), w2_ref[...],
                  preferred_element_type=jnp.float32)                    # Linear(H -> C)
    o_ref[...] = (out + b2_ref[...]).astype(o_ref.dtype)                 # bf16 writeback


def prepare_head_params(w1, b1, w2, b2):
    """One-time (model-load) pad + cast of the frozen head weights to lane-dense,
    MXU-friendly layouts. Zero padding is exact: padded hidden columns feed zero
    rows of w2p; padded output lanes are sliced off by the caller."""
    E, H = w1.shape
    C = w2.shape[1]
    Hp = _round_up(max(H, 128), 128)
    Cp = _round_up(max(C, 128), 128)
    w1p = jnp.zeros((E, Hp), jnp.bfloat16).at[:, :H].set(w1.astype(jnp.bfloat16))
    b1p = jnp.zeros((1, Hp), jnp.float32).at[0, :H].set(b1.astype(jnp.float32))
    w2p = jnp.zeros((Hp, Cp), jnp.bfloat16).at[:H, :C].set(w2.astype(jnp.bfloat16))
    b2p = jnp.zeros((1, Cp), jnp.float32).at[0, :C].set(b2.astype(jnp.float32))
    return w1p, b1p, w2p, b2p, C


def roberta_head_forward(feats, head_params, *, block_b=1024):
    """feats: (B, E) extracted RoBERTa last-position features -> (B, C) logits (bf16)."""
    w1p, b1p, w2p, b2p, C = head_params
    B, E = feats.shape
    Cp = w2p.shape[1]
    assert E % 128 == 0, "emb_dim must be a multiple of 128 (768 in the module)"
    assert E == w1p.shape[0]

    # Batch tile: large (amortizes ~0.35us/step overhead, bigger DMAs) but capped so
    # the grid has >= 2 steps when B allows -> both v7x TensorCores participate.
    Bt = min(_round_up(block_b, 8), _round_up(B, 8))
    two_step_cap = max(_round_up(pl.cdiv(B, 2), 8), 8)
    Bt = max(8, min(Bt, two_step_cap))
    grid = (pl.cdiv(B, Bt),)          # ragged last block; OOB output rows are masked

    # Whole-array, single-buffered VMEM residents (constant across the batch grid).
    vmem_spec = pl.BlockSpec(memory_space=pltpu.MemorySpace.VMEM)

    out = pl.pallas_call(
        mlp_head_kernel,
        out_shape=jax.ShapeDtypeStruct((B, Cp), jnp.bfloat16),
        grid_spec=pltpu.PrefetchScalarGridSpec(
            num_scalar_prefetch=0,
            grid=grid,
            in_specs=[pl.BlockSpec((Bt, E), lambda i: (i, 0)),
                      vmem_spec, vmem_spec, vmem_spec, vmem_spec],
            out_specs=pl.BlockSpec((Bt, Cp), lambda i: (i, 0)),
        ),
        compiler_params=pltpu.CompilerParams(
            dimension_semantics=("parallel",),
            vmem_limit_bytes=32 * 1024 * 1024,
        ),
    )(feats, w1p, b1p, w2p, b2p)
    # Slice away lane padding only; the batch dim is exact (no padded rows emitted).
    return out[:, :C]


def reference(feats, w1, b1, w2, b2):
    """Pure-JAX f32 reference mirroring the PyTorch head (dropout = identity)."""
    h = jnp.tanh(feats @ w1 + b1)
    return h @ w2 + b2


if __name__ == "__main__":
    # Shapes implied by the module's head: emb_dim=768, hidden_layer=100,
    # label_size=len(cf.YList) (small). Small batch for the test.
    # TODO(synk): tokenization and roberta.extract_features (pretrained backbone)
    # run upstream; the kernel consumes the extracted (B, emb_dim) features.
    B, E, H, C = 8, 768, 100, 4

    key = jax.random.PRNGKey(0)
    k_x, k_w1, k_b1, k_w2, k_b2 = jax.random.split(key, 5)

    feats = jax.random.normal(k_x, (B, E), dtype=jnp.float32)
    w1 = jax.random.normal(k_w1, (E, H), dtype=jnp.float32) / (E ** 0.5)
    b1 = 0.01 * jax.random.normal(k_b1, (H,), dtype=jnp.float32)
    w2 = jax.random.normal(k_w2, (H, C), dtype=jnp.float32) / (H ** 0.5)
    b2 = 0.01 * jax.random.normal(k_b2, (C,), dtype=jnp.float32)

    # One-time pad/cast of the frozen head weights (hoisted out of the call path).
    params = prepare_head_params(w1, b1, w2, b2)

    out = jax.block_until_ready(roberta_head_forward(feats, params))
    ref = reference(feats, w1, b1, w2, b2)

    assert out.shape == (B, C), out.shape
    # bf16 inputs/outputs with f32 accumulation -> loose tolerance vs. f32 reference.
    assert jnp.allclose(out.astype(jnp.float32), ref, atol=5e-2, rtol=5e-2), (out, ref)
    print("KERNEL_OK")
</pallas_src>

<mosaic_0001>
module attributes {stable_mosaic.version = 11 : i64} {
  func.func @mlp_head_kernel(%arg0: i32, %arg1: memref<8x768xf32, #tpu.memory_space<vmem>>, %arg2: memref<768x128xbf16, #tpu.memory_space<vmem>>, %arg3: memref<1x128xf32, #tpu.memory_space<vmem>>, %arg4: memref<128x128xbf16, #tpu.memory_space<vmem>>, %arg5: memref<1x128xf32, #tpu.memory_space<vmem>>, %arg6: memref<8x128xbf16, #tpu.memory_space<vmem>>) attributes {dimension_semantics = [#tpu.dimension_semantics<parallel>], iteration_bounds = array<i64: 1>, scalar_prefetch = 0 : i64, scratch_operands = 0 : i64, tpu.core_type = #tpu.core_type<tc>, window_params = [{transform_indices = @transform_0, window_bounds = array<i64: 8, 768>}, {pipeline_mode = #tpu.pipeline_mode<synchronous>, transform_indices = @transform_1, window_bounds = array<i64: 768, 128>}, {pipeline_mode = #tpu.pipeline_mode<synchronous>, transform_indices = @transform_2, window_bounds = array<i64: 1, 128>}, {pipeline_mode = #tpu.pipeline_mode<synchronous>, transform_indices = @transform_3, window_bounds = array<i64: 128, 128>}, {pipeline_mode = #tpu.pipeline_mode<synchronous>, transform_indices = @transform_4, window_bounds = array<i64: 1, 128>}, {transform_indices = @transform_5, window_bounds = array<i64: 8, 128>}]} {
    %c0 = arith.constant 0 : index
    %c0_0 = arith.constant 0 : index
    %0 = vector.load %arg1[%c0, %c0_0] : memref<8x768xf32, #tpu.memory_space<vmem>>, vector<8x768xf32>
    %1 = arith.truncf %0 : vector<8x768xf32> to vector<8x768xbf16>
    %c0_1 = arith.constant 0 : index
    %c0_2 = arith.constant 0 : index
    %2 = vector.load %arg2[%c0_1, %c0_2] : memref<768x128xbf16, #tpu.memory_space<vmem>>, vector<768x128xbf16>
    %cst = arith.constant dense<0.000000e+00> : vector<8x128xf32>
    %3 = tpu.matmul %1, %2, %cst {dimension_numbers = #tpu.dot_dimension_numbers<[1], [0], [0], [1], [0, 0, 1, 1], [], []>} : vector<8x768xbf16>, vector<768x128xbf16>, vector<8x128xf32> -> vector<8x128xf32>
    %c0_3 = arith.constant 0 : index
    %c0_4 = arith.constant 0 : index
    %4 = vector.load %arg3[%c0_3, %c0_4] : memref<1x128xf32, #tpu.memory_space<vmem>>, vector<1x128xf32>
    %5 = vector.broadcast %4 : vector<1x128xf32> to vector<8x128xf32>
    %6 = arith.addf %3, %5 : vector<8x128xf32>
    %7 = math.tanh %6 : vector<8x128xf32>
    %8 = arith.truncf %7 : vector<8x128xf32> to vector<8x128xbf16>
    %c0_5 = arith.constant 0 : index
    %c0_6 = arith.constant 0 : index
    %9 = vector.load %arg4[%c0_5, %c0_6] : memref<128x128xbf16, #tpu.memory_space<vmem>>, vector<128x128xbf16>
    %cst_7 = arith.constant dense<0.000000e+00> : vector<8x128xf32>
    %10 = tpu.matmul %8, %9, %cst_7 {dimension_numbers = #tpu.dot_dimension_numbers<[1], [0], [0], [1], [0, 0, 1, 1], [], []>} : vector<8x128xbf16>, vector<128x128xbf16>, vector<8x128xf32> -> vector<8x128xf32>
    %c0_8 = arith.constant 0 : index
    %c0_9 = arith.constant 0 : index
    %11 = vector.load %arg5[%c0_8, %c0_9] : memref<1x128xf32, #tpu.memory_space<vmem>>, vector<1x128xf32>
    %12 = vector.broadcast %11 : vector<1x128xf32> to vector<8x128xf32>
    %13 = arith.addf %10, %12 : vector<8x128xf32>
    %14 = arith.truncf %13 : vector<8x128xf32> to vector<8x128xbf16>
    %c0_10 = arith.constant 0 : index
    %c0_11 = arith.constant 0 : index
    %15 = vector.load %arg6[%c0_10, %c0_11] : memref<8x128xbf16, #tpu.memory_space<vmem>>, vector<8x128xbf16>
    tpu.vector_store %arg6[%c0_10, %c0_11], %14 {strides = array<i32>} : memref<8x128xbf16, #tpu.memory_space<vmem>>, vector<8x128xbf16>,
    return
  }
  func.func @transform_0(%arg0: i32) -> (i32, i32) {
    %c0_i32 = arith.constant 0 : i32
    %c0_i32_0 = arith.constant 0 : i32
    return %arg0, %c0_i32 : i32, i32
  }
  func.func @transform_1(%arg0: i32) -> (i32, i32) {
    %c0_i32 = arith.constant 0 : i32
    %c0_i32_0 = arith.constant 0 : i32
    %c0_i32_1 = arith.constant 0 : i32
    return %c0_i32, %c0_i32_0 : i32, i32
  }
  func.func @transform_2(%arg0: i32) -> (i32, i32) {
    %c0_i32 = arith.constant 0 : i32
    %c0_i32_0 = arith.constant 0 : i32
    %c0_i32_1 = arith.constant 0 : i32
    return %c0_i32, %c0_i32_0 : i32, i32
  }
  func.func @transform_3(%arg0: i32) -> (i32, i32) {
    %c0_i32 = arith.constant 0 : i32
    %c0_i32_0 = arith.constant 0 : i32
    %c0_i32_1 = arith.constant 0 : i32
    return %c0_i32, %c0_i32_0 : i32, i32
  }
  func.func @transform_4(%arg0: i32) -> (i32, i32) {
    %c0_i32 = arith.constant 0 : i32
    %c0_i32_0 = arith.constant 0 : i32
    %c0_i32_1 = arith.constant 0 : i32
    return %c0_i32, %c0_i32_0 : i32, i32
  }
  func.func @transform_5(%arg0: i32) -> (i32, i32) {
    %c0_i32 = arith.constant 0 : i32
    %c0_i32_0 = arith.constant 0 : i32
    return %arg0, %c0_i32 : i32, i32
  }
}

</mosaic_0001>

<llo_original>
// kernel: tpu_custom_call.1
$region0: #{tpu_custom_call.1}
  #allocation0 [shape = 'u32[]', space=smem, size = 0x4, offset = 0x4, fixed_abs, tag = 'smem constant byte address 0x4 - core index']
  #allocation1 [shape = 'u32[72,128]{1,0:T(1,128)}', space=vmem, size = 0x9000, scoped, tag = 'internal scratch']
  %s0 = inlined_call_operand.hbm [shape: f32[8,768], index: 0, kind: input, shape index: {}]
  %s1 = inlined_call_operand.hbm [shape: bf16[768,128], index: 1, kind: input, shape index: {}]
  %s2 = inlined_call_operand.vmem [shape: f32[1,128], index: 2, kind: input, shape index: {}]
  %s3 = inlined_call_operand.hbm [shape: bf16[128,128], index: 3, kind: input, shape index: {}]
  %s4 = inlined_call_operand.vmem [shape: f32[1,128], index: 4, kind: input, shape index: {}]
  %s5 = inlined_call_operand.hbm [shape: bf16[8,128], index: 5, kind: output, shape index: {}]
  %s6 = sld [smem:[#allocation0]]
  $region42: #{tpu_custom_call.1} parent=0
    _
  %s8 = ssub.s32 1, %s6
  %s9 = scalar_select 0, %s8, %s6
  $region1: #{tpu_custom_call.1} parent=0
    #allocation2 [shape = 'u8[24576]{0}', space=vmem, size = 0x6000, scoped, tag = 'input window, operand 0, single buffered']
    #allocation3 [shape = 's32[1]{0}', space=sflag, size = 0x4, scoped, tag = 'scoped memory for tpu_custom_call.1']
    #allocation4 [shape = 's32[1]{0}', space=sflag, size = 0x4, scoped, tag = 'scoped memory for tpu_custom_call.1']
    #allocation5 [shape = 'u8[196608]{0}', space=vmem, size = 0x30000, scoped, tag = 'input window, operand 1, single buffered']
    #allocation6 [shape = 's32[1]{0}', space=sflag, size = 0x4, scoped, tag = 'scoped memory for tpu_custom_call.1']
    #allocation7 [shape = 'u8[32768]{0}', space=vmem, size = 0x8000, scoped, tag = 'input window, operand 3, single buffered']
    #allocation8 [shape = 'u8[2048]{0}', space=vmem, size = 0x800, scoped, tag = 'output window, operand 0, single buffered']
    %10 = vsyncpa [#allocation3], 0
    %11 = vsyncpa [#allocation6], 0
    %12 = vsyncpa [#allocation4], 0
    // Predicated region
    $region2: #{tpu_custom_call.1} parent=1 // pred_check
      _
    $region3: #{tpu_custom_call.1} parent=1 // pred_check_branch
      %14 = sbr.rel (0) target = $region5
    $region4: #{tpu_custom_call.1} parent=1 // pred_region
      %16 = vsyncadd [#allocation3], 0
      %s18 = sshll.u32 %s0, 4
      %s19 = int_to_ptr.hbm [resolvable:$true] %s18
      %s20 = sshll.u32 [#allocation2], 4
      %s21 = int_to_ptr.vmem [resolvable:$true] %s20
      %23 = dma.hbm_to_vmem [thread:$0]  %s19, 768, %s21, [#allocation3]
    $region5: #{tpu_custom_call.1} parent=1 // pred_fallthru
      _
    // Predicated region
    $region6: #{tpu_custom_call.1} parent=1 // pred_check
      _
    $region7: #{tpu_custom_call.1} parent=1 // pred_check_branch
      %25 = sbr.rel (0) target = $region9
    $region8: #{tpu_custom_call.1} parent=1 // pred_region
      %27 = vsyncadd [#allocation6], 0
      %s28 = sshll.u32 %s1, 4
      %s29 = int_to_ptr.hbm [resolvable:$true] %s28
      %s30 = sshll.u32 [#allocation5], 4
      %s31 = int_to_ptr.vmem [resolvable:$true] %s30
      %36 = dma.hbm_to_vmem [thread:$0]  %s29, 6144, %s31, [#allocation6], 64, 64, 4
    $region9: #{tpu_custom_call.1} parent=1 // pred_fallthru
      _
    // Predicated region
    $region10: #{tpu_custom_call.1} parent=1 // pred_check
      _
    $region11: #{tpu_custom_call.1} parent=1 // pred_check_branch
      %38 = sbr.rel (0) target = $region13
    $region12: #{tpu_custom_call.1} parent=1 // pred_region
      _
    $region13: #{tpu_custom_call.1} parent=1 // pred_fallthru
      _
    // Predicated region
    $region14: #{tpu_custom_call.1} parent=1 // pred_check
      _
    $region15: #{tpu_custom_call.1} parent=1 // pred_check_branch
      %40 = sbr.rel (0) target = $region17
    $region16: #{tpu_custom_call.1} parent=1 // pred_region
      %42 = vsyncadd [#allocation6], 0
      %s43 = sshll.u32 %s3, 4
      %s44 = int_to_ptr.hbm [resolvable:$true] %s43
      %s45 = sshll.u32 [#allocation7], 4
      %s46 = int_to_ptr.vmem [resolvable:$true] %s45
      %51 = dma.hbm_to_vmem [thread:$0]  %s44, 1024, %s46, [#allocation6], 64, 64, 4
    $region17: #{tpu_custom_call.1} parent=1 // pred_fallthru
      _
    // Predicated region
    $region18: #{tpu_custom_call.1} parent=1 // pred_check
      _
    $region19: #{tpu_custom_call.1} parent=1 // pred_check_branch
      %53 = sbr.rel (0) target = $region21
    $region20: #{tpu_custom_call.1} parent=1 // pred_region
      _
    $region21: #{tpu_custom_call.1} parent=1 // pred_fallthru
      _
    // Predicated region
    $region22: #{tpu_custom_call.1} parent=1 // pred_check
      _
    $region23: #{tpu_custom_call.1} parent=1 // pred_check_branch
      %55 = sbr.rel (0) target = $region25
    $region24: #{tpu_custom_call.1} parent=1 // pred_region
      %57 = dma.done [#allocation3], 768
    $region25: #{tpu_custom_call.1} parent=1 // pred_fallthru
      _
    // Predicated region
    $region26: #{tpu_custom_call.1} parent=1 // pred_check
      _
    $region27: #{tpu_custom_call.1} parent=1 // pred_check_branch
      %59 = sbr.rel (0) target = $region29
    $region28: #{tpu_custom_call.1} parent=1 // pred_region
      %61 = dma.done [#allocation6], 6144
    $region29: #{tpu_custom_call.1} parent=1 // pred_fallthru
      _
    // Predicated region
    $region30: #{tpu_custom_call.1} parent=1 // pred_check
      _
    $region31: #{tpu_custom_call.1} parent=1 // pred_check_branch
      %63 = sbr.rel (0) target = $region33
    $region32: #{tpu_custom_call.1} parent=1 // pred_region
      %65 = dma.done [#allocation6], 1024
    $region33: #{tpu_custom_call.1} parent=1 // pred_fallthru
      _
    %v66 = vld [vmem:[#allocation2] sm:$0xff]
    %v67 = vld [vmem:[#allocation2 + $0x8] sm:$0xff]
    %v68 = vld [vmem:[#allocation2 + $0x10] sm:$0xff]
    %v69 = vld [vmem:[#allocation2 + $0x18] sm:$0xff]
    %v70 = vld [vmem:[#allocation2 + $0x20] sm:$0xff]
    %v71 = vld [vmem:[#allocation2 + $0x28] sm:$0xff]
    %v72 = vpack.c.bf16 %v66, %v66
    %v73 = vpack.c.bf16 %v67, %v67
    %v74 = vpack.c.bf16 %v68, %v68
    %v75 = vpack.c.bf16 %v69, %v69
    %v76 = vpack.c.bf16 %v70, %v70
    %v77 = vpack.c.bf16 %v71, %v71
    %v78 = vld [vmem:[#allocation5] sm:$0xf]
    %v79 = vld [vmem:[#allocation5 + $0x4] sm:$0xf]
    %v80 = vld [vmem:[#allocation5 + $0x8] sm:$0xf]
    %v81 = vld [vmem:[#allocation5 + $0xc] sm:$0xf]
    %v82 = vld [vmem:[#allocation5 + $0x10] sm:$0xf]
    %v83 = vld [vmem:[#allocation5 + $0x14] sm:$0xf]
    %v84 = vld [vmem:[#allocation5 + $0x18] sm:$0xf]
    %v85 = vld [vmem:[#allocation5 + $0x1c] sm:$0xf]
    %v86 = vld [vmem:[#allocation5 + $0x20] sm:$0xf]
    %v87 = vld [vmem:[#allocation5 + $0x24] sm:$0xf]
    %v88 = vld [vmem:[#allocation5 + $0x28] sm:$0xf]
    %v89 = vld [vmem:[#allocation5 + $0x2c] sm:$0xf]
    %v90 = vld [vmem:[#allocation5 + $0x30] sm:$0xf]
    %v91 = vld [vmem:[#allocation5 + $0x34] sm:$0xf]
    %v92 = vld [vmem:[#allocation5 + $0x38] sm:$0xf]
    %v93 = vld [vmem:[#allocation5 + $0x3c] sm:$0xf]
    %v94 = vld [vmem:[#allocation5 + $0x40] sm:$0xf]
    %v95 = vld [vmem:[#allocation5 + $0x44] sm:$0xf]
    %v96 = vld [vmem:[#allocation5 + $0x48] sm:$0xf]
    %v97 = vld [vmem:[#allocation5 + $0x4c] sm:$0xf]
    %v98 = vld [vmem:[#allocation5 + $0x50] sm:$0xf]
    %v99 = vld [vmem:[#allocation5 + $0x54] sm:$0xf]
    %v100 = vld [vmem:[#allocation5 + $0x58] sm:$0xf]
    %v101 = vld [vmem:[#allocation5 + $0x5c] sm:$0xf]
    %v102 = vld [vmem:[#allocation5 + $0x60] sm:$0xf]
    %v103 = vld [vmem:[#allocation5 + $0x64] sm:$0xf]
    %v104 = vld [vmem:[#allocation5 + $0x68] sm:$0xf]
    %v105 = vld [vmem:[#allocation5 + $0x6c] sm:$0xf]
    %v106 = vld [vmem:[#allocation5 + $0x70] sm:$0xf]
    %v107 = vld [vmem:[#allocation5 + $0x74] sm:$0xf]
    %v108 = vld [vmem:[#allocation5 + $0x78] sm:$0xf]
    %v109 = vld [vmem:[#allocation5 + $0x7c] sm:$0xf]
    %v110 = vld [vmem:[#allocation5 + $0x80] sm:$0xf]
    %v111 = vld [vmem:[#allocation5 + $0x84] sm:$0xf]
    %v112 = vld [vmem:[#allocation5 + $0x88] sm:$0xf]
    %v113 = vld [vmem:[#allocation5 + $0x8c] sm:$0xf]
    %v114 = vld [vmem:[#allocation5 + $0x90] sm:$0xf]
    %v115 = vld [vmem:[#allocation5 + $0x94] sm:$0xf]
    %v116 = vld [vmem:[#allocation5 + $0x98] sm:$0xf]
    %v117 = vld [vmem:[#allocation5 + $0x9c] sm:$0xf]
    %v118 = vld [vmem:[#allocation5 + $0xa0] sm:$0xf]
    %v119 = vld [vmem:[#allocation5 + $0xa4] sm:$0xf]
    %v120 = vld [vmem:[#allocation5 + $0xa8] sm:$0xf]
    %v121 = vld [vmem:[#allocation5 + $0xac] sm:$0xf]
    %v122 = vld [vmem:[#allocation5 + $0xb0] sm:$0xf]
    %v123 = vld [vmem:[#allocation5 + $0xb4] sm:$0xf]
    %v124 = vld [vmem:[#allocation5 + $0xb8] sm:$0xf]
    %v125 = vld [vmem:[#allocation5 + $0xbc] sm:$0xf]
    %v126 = vld [vmem:[#allocation5 + $0xc0] sm:$0xf]
    %v127 = vld [vmem:[#allocation5 + $0xc4] sm:$0xf]
    %v128 = vld [vmem:[#allocation5 + $0xc8] sm:$0xf]
    %v129 = vld [vmem:[#allocation5 + $0xcc] sm:$0xf]
    %v130 = vld [vmem:[#allocation5 + $0xd0] sm:$0xf]
    %v131 = vld [vmem:[#allocation5 + $0xd4] sm:$0xf]
    %v132 = vld [vmem:[#allocation5 + $0xd8] sm:$0xf]
    %v133 = vld [vmem:[#allocation5 + $0xdc] sm:$0xf]
    %v134 = vld [vmem:[#allocation5 + $0xe0] sm:$0xf]
    %v135 = vld [vmem:[#allocation5 + $0xe4] sm:$0xf]
    %v136 = vld [vmem:[#allocation5 + $0xe8] sm:$0xf]
    %v137 = vld [vmem:[#allocation5 + $0xec] sm:$0xf]
    %v138 = vld [vmem:[#allocation5 + $0xf0] sm:$0xf]
    %v139 = vld [vmem:[#allocation5 + $0xf4] sm:$0xf]
    %v140 = vld [vmem:[#allocation5 + $0xf8] sm:$0xf]
    %v141 = vld [vmem:[#allocation5 + $0xfc] sm:$0xf]
    %v142 = vld [vmem:[#allocation5 + $0x100] sm:$0xf]
    %v143 = vld [vmem:[#allocation5 + $0x104] sm:$0xf]
    %v144 = vld [vmem:[#allocation5 + $0x108] sm:$0xf]
    %v145 = vld [vmem:[#allocation5 + $0x10c] sm:$0xf]
    %v146 = vld [vmem:[#allocation5 + $0x110] sm:$0xf]
    %v147 = vld [vmem:[#allocation5 + $0x114] sm:$0xf]
    %v148 = vld [vmem:[#allocation5 + $0x118] sm:$0xf]
    %v149 = vld [vmem:[#allocation5 + $0x11c] sm:$0xf]
    %v150 = vld [vmem:[#allocation5 + $0x120] sm:$0xf]
    %v151 = vld [vmem:[#allocation5 + $0x124] sm:$0xf]
    %v152 = vld [vmem:[#allocation5 + $0x128] sm:$0xf]
    %v153 = vld [vmem:[#allocation5 + $0x12c] sm:$0xf]
    %v154 = vld [vmem:[#allocation5 + $0x130] sm:$0xf]
    %v155 = vld [vmem:[#allocation5 + $0x134] sm:$0xf]
    %v156 = vld [vmem:[#allocation5 + $0x138] sm:$0xf]
    %v157 = vld [vmem:[#allocation5 + $0x13c] sm:$0xf]
    %v158 = vld [vmem:[#allocation5 + $0x140] sm:$0xf]
    %v159 = vld [vmem:[#allocation5 + $0x144] sm:$0xf]
    %v160 = vld [vmem:[#allocation5 + $0x148] sm:$0xf]
    %v161 = vld [vmem:[#allocation5 + $0x14c] sm:$0xf]
    %v162 = vld [vmem:[#allocation5 + $0x150] sm:$0xf]
    %v163 = vld [vmem:[#allocation5 + $0x154] sm:$0xf]
    %v164 = vld [vmem:[#allocation5 + $0x158] sm:$0xf]
    %v165 = vld [vmem:[#allocation5 + $0x15c] sm:$0xf]
    %v166 = vld [vmem:[#allocation5 + $0x160] sm:$0xf]
    %v167 = vld [vmem:[#allocation5 + $0x164] sm:$0xf]
    %v168 = vld [vmem:[#allocation5 + $0x168] sm:$0xf]
    %v169 = vld [vmem:[#allocation5 + $0x16c] sm:$0xf]
    %v170 = vld [vmem:[#allocation5 + $0x170] sm:$0xf]
    %v171 = vld [vmem:[#allocation5 + $0x174] sm:$0xf]
    %v172 = vld [vmem:[#allocation5 + $0x178] sm:$0xf]
    %v173 = vld [vmem:[#allocation5 + $0x17c] sm:$0xf]
    %v174 = vld [vmem:[%s2] sm:$0x1]
    %v176 = vperm.slane %v174, 0
    %v274 = vunpack.c.l.b16 %v78
    %v275 = vunpack.c.l.b16 %v79
    %v276 = vunpack.c.l.b16 %v80
    %v277 = vunpack.c.l.b16 %v81
    %v278 = vunpack.c.l.b16 %v82
    %v279 = vunpack.c.l.b16 %v83
    %v280 = vunpack.c.l.b16 %v84
    %v281 = vunpack.c.l.b16 %v85
    %v282 = vunpack.c.l.b16 %v86
    %v283 = vunpack.c.l.b16 %v87
    %v284 = vunpack.c.l.b16 %v88
    %v285 = vunpack.c.l.b16 %v89
    %v286 = vunpack.c.l.b16 %v90
    %v287 = vunpack.c.l.b16 %v91
    %v288 = vunpack.c.l.b16 %v92
    %v289 = vunpack.c.l.b16 %v93
    %v290 = vunpack.c.l.b16 %v94
    %v291 = vunpack.c.l.b16 %v95
    %v292 = vunpack.c.l.b16 %v96
    %v293 = vunpack.c.l.b16 %v97
    %v294 = vunpack.c.l.b16 %v98
    %v295 = vunpack.c.l.b16 %v99
    %v296 = vunpack.c.l.b16 %v100
    %v297 = vunpack.c.l.b16 %v101
    %v298 = vunpack.c.l.b16 %v102
    %v299 = vunpack.c.l.b16 %v103
    %v300 = vunpack.c.l.b16 %v104
    %v301 = vunpack.c.l.b16 %v105
    %v302 = vunpack.c.l.b16 %v106
    %v303 = vunpack.c.l.b16 %v107
    %v304 = vunpack.c.l.b16 %v108
    %v305 = vunpack.c.l.b16 %v109
    %v306 = vunpack.c.l.b16 %v110
    %v307 = vunpack.c.l.b16 %v111
    %v308 = vunpack.c.l.b16 %v112
    %v309 = vunpack.c.l.b16 %v113
    %v310 = vunpack.c.l.b16 %v114
    %v311 = vunpack.c.l.b16 %v115
    %v312 = vunpack.c.l.b16 %v116
    %v313 = vunpack.c.l.b16 %v117
    %v314 = vunpack.c.l.b16 %v118
    %v315 = vunpack.c.l.b16 %v119
    %v316 = vunpack.c.l.b16 %v120
    %v317 = vunpack.c.l.b16 %v121
    %v318 = vunpack.c.l.b16 %v122
    %v319 = vunpack.c.l.b16 %v123
    %v320 = vunpack.c.l.b16 %v124
    %v321 = vunpack.c.l.b16 %v125
    %v322 = vunpack.c.l.b16 %v126
    %v323 = vunpack.c.l.b16 %v127
    %v324 = vunpack.c.l.b16 %v128
    %v325 = vunpack.c.l.b16 %v129
    %v326 = vunpack.c.l.b16 %v130
    %v327 = vunpack.c.l.b16 %v131
    %v328 = vunpack.c.l.b16 %v132
    %v329 = vunpack.c.l.b16 %v133
    %v330 = vunpack.c.l.b16 %v134
    %v331 = vunpack.c.l.b16 %v135
    %v332 = vunpack.c.l.b16 %v136
    %v333 = vunpack.c.l.b16 %v137
    %v334 = vunpack.c.l.b16 %v138
    %v335 = vunpack.c.l.b16 %v139
    %v336 = vunpack.c.l.b16 %v140
    %v337 = vunpack.c.l.b16 %v141
    %v338 = vunpack.c.l.b16 %v142
    %v339 = vunpack.c.l.b16 %v143
    %v340 = vunpack.c.l.b16 %v144
    %v341 = vunpack.c.l.b16 %v145
    %v342 = vunpack.c.l.b16 %v146
    %v343 = vunpack.c.l.b16 %v147
    %v344 = vunpack.c.l.b16 %v148
    %v345 = vunpack.c.l.b16 %v149
    %v346 = vunpack.c.l.b16 %v150
    %v347 = vunpack.c.l.b16 %v151
    %v348 = vunpack.c.l.b16 %v152
    %v349 = vunpack.c.l.b16 %v153
    %v350 = vunpack.c.l.b16 %v154
    %v351 = vunpack.c.l.b16 %v155
    %v352 = vunpack.c.l.b16 %v156
    %v353 = vunpack.c.l.b16 %v157
    %v354 = vunpack.c.l.b16 %v158
    %v355 = vunpack.c.l.b16 %v159
    %v356 = vunpack.c.l.b16 %v160
    %v357 = vunpack.c.l.b16 %v161
    %v358 = vunpack.c.l.b16 %v162
    %v359 = vunpack.c.l.b16 %v163
    %v360 = vunpack.c.l.b16 %v164
    %v361 = vunpack.c.l.b16 %v165
    %v362 = vunpack.c.l.b16 %v166
    %v363 = vunpack.c.l.b16 %v167
    %v364 = vunpack.c.l.b16 %v168
    %v365 = vunpack.c.l.b16 %v169
    %v366 = vunpack.c.l.b16 %v170
    %v367 = vunpack.c.l.b16 %v171
    %v368 = vunpack.c.l.b16 %v172
    %v369 = vunpack.c.l.b16 %v173
    %v370 = vpack.c.b16 %v275, %v274
    %v371 = vpack.c.b16 %v277, %v276
    %v372 = vpack.c.b16 %v279, %v278
    %v373 = vpack.c.b16 %v281, %v280
    %v374 = vpack.c.b16 %v283, %v282
    %v375 = vpack.c.b16 %v285, %v284
    %v376 = vpack.c.b16 %v287, %v286
    %v377 = vpack.c.b16 %v289, %v288
    %v378 = vpack.c.b16 %v291, %v290
    %v379 = vpack.c.b16 %v293, %v292
    %v380 = vpack.c.b16 %v295, %v294
    %v381 = vpack.c.b16 %v297, %v296
    %v382 = vpack.c.b16 %v299, %v298
    %v383 = vpack.c.b16 %v301, %v300
    %v384 = vpack.c.b16 %v303, %v302
    %v385 = vpack.c.b16 %v305, %v304
    %v386 = vpack.c.b16 %v307, %v306
    %v387 = vpack.c.b16 %v309, %v308
    %v388 = vpack.c.b16 %v311, %v310
    %v389 = vpack.c.b16 %v313, %v312
    %v390 = vpack.c.b16 %v315, %v314
    %v391 = vpack.c.b16 %v317, %v316
    %v392 = vpack.c.b16 %v319, %v318
    %v393 = vpack.c.b16 %v321, %v320
    %v394 = vpack.c.b16 %v323, %v322
    %v395 = vpack.c.b16 %v325, %v324
    %v396 = vpack.c.b16 %v327, %v326
    %v397 = vpack.c.b16 %v329, %v328
    %v398 = vpack.c.b16 %v331, %v330
    %v399 = vpack.c.b16 %v333, %v332
    %v400 = vpack.c.b16 %v335, %v334
    %v401 = vpack.c.b16 %v337, %v336
    %v402 = vpack.c.b16 %v339, %v338
    %v403 = vpack.c.b16 %v341, %v340
    %v404 = vpack.c.b16 %v343, %v342
    %v405 = vpack.c.b16 %v345, %v344
    %v406 = vpack.c.b16 %v347, %v346
    %v407 = vpack.c.b16 %v349, %v348
    %v408 = vpack.c.b16 %v351, %v350
    %v409 = vpack.c.b16 %v353, %v352
    %v410 = vpack.c.b16 %v355, %v354
    %v411 = vpack.c.b16 %v357, %v356
    %v412 = vpack.c.b16 %v359, %v358
    %v413 = vpack.c.b16 %v361, %v360
    %v414 = vpack.c.b16 %v363, %v362
    %v415 = vpack.c.b16 %v365, %v364
    %v416 = vpack.c.b16 %v367, %v366
    %v417 = vpack.c.b16 %v369, %v368
    %466 = vmatpush.bf16.msra.mxu0 %v377
    %467 = vmatpush.bf16.msra.mxu0 %v376
    %468 = vmatpush.bf16.msra.mxu0 %v375
    %469 = vmatpush.bf16.msra.mxu0 %v374
    %470 = vmatpush.bf16.msra.mxu0 %v373
    %471 = vmatpush.bf16.msra.mxu0 %v372
    %472 = vmatpush.bf16.msra.mxu0 %v371
    %473 = vmatpush.bf16.msra.mxu0 %v370
    %474 = vmatmul.bf16.gmra.mxu0 %v72
    %v475 = vpop.f32.mrf.mxu0
    %v476 = vadd.f32 %v176, %v475
    %v477 = vpop.f32.mrf.mxu0
    %478 = vdwg.mxu0
    %479 = vmatpush.bf16.msra.mxu0 %v385
    %480 = vmatpush.bf16.msra.mxu0 %v384
    %481 = vmatpush.bf16.msra.mxu0 %v383
    %482 = vmatpush.bf16.msra.mxu0 %v382
    %483 = vmatpush.bf16.msra.mxu0 %v381
    %484 = vmatpush.bf16.msra.mxu0 %v380
    %485 = vmatpush.bf16.msra.mxu0 %v379
    %486 = vmatpush.bf16.msra.mxu0 %v378
    %487 = vmatmul.bf16.gmra.mxu0 %v73
    %v488 = vpop.f32.mrf.mxu0
    %v489 = vadd.f32 %v476, %v488
    %v490 = vpop.f32.mrf.mxu0
    %491 = vdwg.mxu0
    %492 = vmatpush.bf16.msra.mxu0 %v393
    %493 = vmatpush.bf16.msra.mxu0 %v392
    %494 = vmatpush.bf16.msra.mxu0 %v391
    %495 = vmatpush.bf16.msra.mxu0 %v390
    %496 = vmatpush.bf16.msra.mxu0 %v389
    %497 = vmatpush.bf16.msra.mxu0 %v388
    %498 = vmatpush.bf16.msra.mxu0 %v387
    %499 = vmatpush.bf16.msra.mxu0 %v386
    %500 = vmatmul.bf16.gmra.mxu0 %v74
    %v501 = vpop.f32.mrf.mxu0
    %v502 = vadd.f32 %v489, %v501
    %v503 = vpop.f32.mrf.mxu0
    %504 = vdwg.mxu0
    %505 = vmatpush.bf16.msra.mxu0 %v401
    %506 = vmatpush.bf16.msra.mxu0 %v400
    %507 = vmatpush.bf16.msra.mxu0 %v399
    %508 = vmatpush.bf16.msra.mxu0 %v398
    %509 = vmatpush.bf16.msra.mxu0 %v397
    %510 = vmatpush.bf16.msra.mxu0 %v396
    %511 = vmatpush.bf16.msra.mxu0 %v395
    %512 = vmatpush.bf16.msra.mxu0 %v394
    %513 = vmatmul.bf16.gmra.mxu0 %v75
    %v514 = vpop.f32.mrf.mxu0
    %v515 = vadd.f32 %v502, %v514
    %v516 = vpop.f32.mrf.mxu0
    %517 = vdwg.mxu0
    %518 = vmatpush.bf16.msra.mxu0 %v409
    %519 = vmatpush.bf16.msra.mxu0 %v408
    %520 = vmatpush.bf16.msra.mxu0 %v407
    %521 = vmatpush.bf16.msra.mxu0 %v406
    %522 = vmatpush.bf16.msra.mxu0 %v405
    %523 = vmatpush.bf16.msra.mxu0 %v404
    %524 = vmatpush.bf16.msra.mxu0 %v403
    %525 = vmatpush.bf16.msra.mxu0 %v402
    %526 = vmatmul.bf16.gmra.mxu0 %v76
    %v527 = vpop.f32.mrf.mxu0
    %v528 = vadd.f32 %v515, %v527
    %v529 = vpop.f32.mrf.mxu0
    %530 = vdwg.mxu0
    %531 = vmatpush.bf16.msra.mxu0 %v417
    %532 = vmatpush.bf16.msra.mxu0 %v416
    %533 = vmatpush.bf16.msra.mxu0 %v415
    %534 = vmatpush.bf16.msra.mxu0 %v414
    %535 = vmatpush.bf16.msra.mxu0 %v413
    %536 = vmatpush.bf16.msra.mxu0 %v412
    %537 = vmatpush.bf16.msra.mxu0 %v411
    %538 = vmatpush.bf16.msra.mxu0 %v410
    %539 = vmatmul.bf16.gmra.mxu0 %v77
    %v540 = vpop.f32.mrf.mxu0
    %v541 = vadd.f32 %v528, %v540
    %v542 = vpop.f32.mrf.mxu0
    %543 = vdwg.mxu0
    %v544 = vtanh.pop %v541
    %v545 = vpack.c.bf16 %v544, %v544
    %v546 = vld [vmem:[#allocation7] sm:$0xf]
    %v547 = vld [vmem:[#allocation7 + $0x4] sm:$0xf]
    %v548 = vld [vmem:[#allocation7 + $0x8] sm:$0xf]
    %v549 = vld [vmem:[#allocation7 + $0xc] sm:$0xf]
    %v550 = vld [vmem:[#allocation7 + $0x10] sm:$0xf]
    %v551 = vld [vmem:[#allocation7 + $0x14] sm:$0xf]
    %v552 = vld [vmem:[#allocation7 + $0x18] sm:$0xf]
    %v553 = vld [vmem:[#allocation7 + $0x1c] sm:$0xf]
    %v554 = vld [vmem:[#allocation7 + $0x20] sm:$0xf]
    %v555 = vld [vmem:[#allocation7 + $0x24] sm:$0xf]
    %v556 = vld [vmem:[#allocation7 + $0x28] sm:$0xf]
    %v557 = vld [vmem:[#allocation7 + $0x2c] sm:$0xf]
    %v558 = vld [vmem:[#allocation7 + $0x30] sm:$0xf]
    %v559 = vld [vmem:[#allocation7 + $0x34] sm:$0xf]
    %v560 = vld [vmem:[#allocation7 + $0x38] sm:$0xf]
    %v561 = vld [vmem:[#allocation7 + $0x3c] sm:$0xf]
    %v562 = vld [vmem:[%s4] sm:$0x1]
    %v564 = vperm.slane %v562, 0
    %v582 = vunpack.c.l.b16 %v546
    %v583 = vunpack.c.l.b16 %v547
    %v584 = vunpack.c.l.b16 %v548
    %v585 = vunpack.c.l.b16 %v549
    %v586 = vunpack.c.l.b16 %v550
    %v587 = vunpack.c.l.b16 %v551
    %v588 = vunpack.c.l.b16 %v552
    %v589 = vunpack.c.l.b16 %v553
    %v590 = vunpack.c.l.b16 %v554
    %v591 = vunpack.c.l.b16 %v555
    %v592 = vunpack.c.l.b16 %v556
    %v593 = vunpack.c.l.b16 %v557
    %v594 = vunpack.c.l.b16 %v558
    %v595 = vunpack.c.l.b16 %v559
    %v596 = vunpack.c.l.b16 %v560
    %v597 = vunpack.c.l.b16 %v561
    %v598 = vpack.c.b16 %v583, %v582
    %v599 = vpack.c.b16 %v585, %v584
    %v600 = vpack.c.b16 %v587, %v586
    %v601 = vpack.c.b16 %v589, %v588
    %v602 = vpack.c.b16 %v591, %v590
    %v603 = vpack.c.b16 %v593, %v592
    %v604 = vpack.c.b16 %v595, %v594
    %v605 = vpack.c.b16 %v597, %v596
    %614 = vmatpush.bf16.msra.mxu0 %v605
    %615 = vmatpush.bf16.msra.mxu0 %v604
    %616 = vmatpush.bf16.msra.mxu0 %v603
    %617 = vmatpush.bf16.msra.mxu0 %v602
    %618 = vmatpush.bf16.msra.mxu0 %v601
    %619 = vmatpush.bf16.msra.mxu0 %v600
    %620 = vmatpush.bf16.msra.mxu0 %v599
    %621 = vmatpush.bf16.msra.mxu0 %v598
    %622 = vmatmul.bf16.gmra.mxu0 %v545
    %v623 = vpop.f32.mrf.mxu0
    %v624 = vadd.f32 %v564, %v623
    %v625 = vpop.f32.mrf.mxu0
    %626 = vdwg.mxu0
    %v627 = vpack.c.bf16 %v624, %v624
    %628 = vst [vmem:[#allocation8] sm:$0xf] %v627
    // Predicated region
    $region34: #{tpu_custom_call.1} parent=1 // pred_check
      _
    $region35: #{tpu_custom_call.1} parent=1 // pred_check_branch
      %630 = sbr.rel (0) target = $region37
    $region36: #{tpu_custom_call.1} parent=1 // pred_region
      %632 = vsyncadd [#allocation4], 0
      %s634 = sshll.u32 [#allocation8], 4
      %s635 = int_to_ptr.vmem [resolvable:$true] %s634
      %s636 = sshll.u32 %s5, 4
      %s637 = int_to_ptr.hbm [resolvable:$true] %s636
      %639 = dma.vmem_to_hbm [thread:$0]  %s635, 64, %s637, [#allocation4]
    $region37: #{tpu_custom_call.1} parent=1 // pred_fallthru
      _
    // Predicated region
    $region38: #{tpu_custom_call.1} parent=1 // pred_check
      _
    $region39: #{tpu_custom_call.1} parent=1 // pred_check_branch
      %641 = sbr.rel (0) target = $region41
    $region40: #{tpu_custom_call.1} parent=1 // pred_region
      %643 = dma.done [#allocation4], 64
    $region41: #{tpu_custom_call.1} parent=1 // pred_fallthru
      _
    %644 = vsyncpa [#allocation3], 1
    %645 = vsyncpa [#allocation6], 1
    %646 = vsyncpa [#allocation4], 1

</llo_original>
